<compile_context>
chip_gen: v6e
topology: v6e:2x2x1
jax: 0.10.0
libtpu: 0.0.40
codegen_flags: <defaults>
</compile_context>

<pallas_src>
import math

import jax
import jax.numpy as jnp
from jax.experimental import pallas as pl
from jax.experimental.pallas import tpu as pltpu

_SQRT_2_OVER_PI = math.sqrt(2.0 / math.pi)
_GELU_COEF = 0.044715

_MIN_GRID_STEPS = 4  # >= 2 steps per TensorCore on v7x megacore


def _adapter_kernel(x_ref, w1_ref, b1_ref, w2_ref, b2_ref, o_ref):
    x = x_ref[...]                                    # (tm, D), activation dtype

    # ---- Linear 1 (MXU, f32 accumulate) + bias ----
    h = jnp.dot(x, w1_ref[...], preferred_element_type=jnp.float32)
    h = h + b1_ref[...].astype(jnp.float32)           # (tm, Hp) f32

    # ---- GELU (tanh approximation), f32 epilogue; h*h computed once ----
    h2 = h * h
    inner = _SQRT_2_OVER_PI * h * (1.0 + _GELU_COEF * h2)
    g = 0.5 * h * (1.0 + jnp.tanh(inner))             # tanh -> EUP slot

    # ---- Linear 2 (MXU, f32 accumulate) + bias + residual ----
    y = jnp.dot(g.astype(x.dtype), w2_ref[...], preferred_element_type=jnp.float32)
    y = y + b2_ref[...].astype(jnp.float32)
    y = y + x.astype(jnp.float32)                      # residual from VMEM tile

    o_ref[...] = y.astype(o_ref.dtype)


def _round_down(x, m):
    return (x // m) * m


def bert_adapter_forward(hn, w1, b1, w2, b2, *, target_tile_bytes=None):
    """out = GELU(hn @ w1 + b1) @ w2 + b2 + hn, fused in one Pallas kernel.

    hn: (..., D);  w1: (D, H);  b1: (H,);  w2: (H, D);  b2: (D,)
    (Weights are stored transposed relative to nn.Linear.weight: pass W.T.)
    """
    orig_shape = hn.shape
    D = orig_shape[-1]
    H = w1.shape[-1]
    assert w1.shape == (D, H) and w2.shape == (H, D)
    assert b1.shape == (H,) and b2.shape == (D,)

    rows = 1
    for d in orig_shape[:-1]:
        rows *= d
    x2d = hn.reshape(rows, D)

    # --- Zero-pad the adapter hidden dim to a full 128-lane tile (exact). ---
    Hp = 128 if H < 128 else H
    if Hp != H:
        w1 = jnp.pad(w1, ((0, 0), (0, Hp - H)))
        b1 = jnp.pad(b1, ((0, Hp - H),))
        w2 = jnp.pad(w2, ((0, Hp - H), (0, 0)))
    b1_2d = b1.reshape(1, Hp)
    b2_2d = b2.reshape(1, D)

    itemsize = jnp.dtype(hn.dtype).itemsize
    w_itemsize = jnp.dtype(w1.dtype).itemsize

    # --- Generation-aware tile budget, gated on physical VMEM. ---
    try:
        info = pltpu.get_tpu_info()
        vmem_phys = int(getattr(info, "vmem_capacity_bytes", 64 * 1024 * 1024))
    except Exception:
        vmem_phys = 64 * 1024 * 1024
    if target_tile_bytes is None:
        if vmem_phys >= 100 * 1024 * 1024:   # v5e / v6e: 128 MiB physical VMEM
            target_tile_bytes = 8 * 1024 * 1024
        else:                                # v7x: 64 MiB physical VMEM
            target_tile_bytes = 4 * 1024 * 1024

    # --- Row tile: MXU-aligned (multiple of 256 covers v5e's 128 too). ---
    ALIGN = 256
    tm = _round_down(target_tile_bytes // max(1, D * itemsize), ALIGN)
    tm = max(tm, ALIGN)
    # Keep the grid >= _MIN_GRID_STEPS when rows permit (feed both v7x cores).
    if rows >= _MIN_GRID_STEPS * ALIGN:
        tm = min(tm, max(ALIGN, _round_down(rows // _MIN_GRID_STEPS, ALIGN)))
    if tm >= rows:
        tm = rows   # small inputs: one full-extent block (exempt from (8,128))

    grid = (pl.cdiv(rows, tm),)

    # --- Explicit scoped-VMEM limit sized to the actual footprint. ---
    act_bytes = 2 * (2 * tm * D * itemsize)                 # x + out, double-buffered
    weight_bytes = (2 * D * Hp + Hp + D) * w_itemsize       # W1, W2, b1, b2
    interm_bytes = tm * (2 * Hp + 2 * D) * 4                # h, g, y, x_f32 (f32)
    vmem_needed = act_bytes + 2 * weight_bytes + interm_bytes
    vmem_cap = max(32 * 1024 * 1024, vmem_phys - 16 * 1024 * 1024)
    vmem_limit = int(min(max(int(vmem_needed * 3 // 2) + (4 << 20),
                             32 * 1024 * 1024), vmem_cap))

    cost = pl.CostEstimate(
        flops=4 * rows * D * Hp + 12 * rows * Hp + 3 * rows * D,
        transcendentals=rows * Hp,
        bytes_accessed=2 * rows * D * itemsize + weight_bytes,
    )

    def build(single_buffer_weights):
        wkw = {"pipeline_mode": pl.Buffered(1)} if single_buffer_weights else {}
        in_specs = [
            pl.BlockSpec((tm, D), lambda i: (i, 0)),          # activation row tile
            pl.BlockSpec((D, Hp), lambda i: (0, 0), **wkw),   # W1 (resident)
            pl.BlockSpec((1, Hp), lambda i: (0, 0), **wkw),   # b1 (resident)
            pl.BlockSpec((Hp, D), lambda i: (0, 0), **wkw),   # W2 (resident)
            pl.BlockSpec((1, D), lambda i: (0, 0), **wkw),    # b2 (resident)
        ]
        return pl.pallas_call(
            _adapter_kernel,
            out_shape=jax.ShapeDtypeStruct((rows, D), hn.dtype),
            grid=grid,
            in_specs=in_specs,
            out_specs=pl.BlockSpec((tm, D), lambda i: (i, 0)),
            compiler_params=pltpu.CompilerParams(
                dimension_semantics=("parallel",),
                vmem_limit_bytes=vmem_limit),
            cost_estimate=cost,
        )

    try:
        out = build(True)(x2d, w1, b1_2d, w2, b2_2d)
    except Exception:
        # pl.Buffered(1) on weight specs not supported by this build; fall back
        # to default double-buffered weights (correctness unchanged).
        out = build(False)(x2d, w1, b1_2d, w2, b2_2d)
    return out.reshape(orig_shape)


def _adapter_ref(hn, w1, b1, w2, b2):
    xf = hn.astype(jnp.float32)
    h = xf @ w1.astype(jnp.float32) + b1.astype(jnp.float32)
    g = 0.5 * h * (1.0 + jnp.tanh(_SQRT_2_OVER_PI * (h + _GELU_COEF * h ** 3)))
    y = g @ w2.astype(jnp.float32) + b2.astype(jnp.float32)
    return (y + xf).astype(hn.dtype)


if __name__ == "__main__":
    key = jax.random.PRNGKey(0)
    k_x, k_w1, k_w2 = jax.random.split(key, 3)

    # BERT-ish small shape: (batch=2, seq=8, input_dim=32), adapter hidden=16.
    B, S, D, H = 2, 8, 32, 16
    hn = jax.random.normal(k_x, (B, S, D), dtype=jnp.float32)

    # PyTorch init: weight ~ N(0, 0.01), bias = 0.  (Weights stored transposed
    # relative to nn.Linear so the kernel computes x @ W directly.)
    w1 = 0.01 * jax.random.normal(k_w1, (D, H), dtype=jnp.float32)
    b1 = jnp.zeros((H,), dtype=jnp.float32)
    w2 = 0.01 * jax.random.normal(k_w2, (H, D), dtype=jnp.float32)
    b2 = jnp.zeros((D,), dtype=jnp.float32)

    out = jax.block_until_ready(bert_adapter_forward(hn, w1, b1, w2, b2))

    ref = _adapter_ref(hn, w1, b1, w2, b2)
    assert out.shape == hn.shape and out.dtype == hn.dtype
    assert jnp.allclose(out, ref, atol=1e-5, rtol=1e-5)
    print("KERNEL_OK")
</pallas_src>

<mosaic_0001>
module attributes {stable_mosaic.version = 11 : i64} {
  func.func @_adapter_kernel(%arg0: i32, %arg1: memref<16x32xf32, #tpu.memory_space<vmem>>, %arg2: memref<32x128xf32, #tpu.memory_space<vmem>>, %arg3: memref<1x128xf32, #tpu.memory_space<vmem>>, %arg4: memref<128x32xf32, #tpu.memory_space<vmem>>, %arg5: memref<1x32xf32, #tpu.memory_space<vmem>>, %arg6: memref<16x32xf32, #tpu.memory_space<vmem>>) attributes {dimension_semantics = [#tpu.dimension_semantics<parallel>], iteration_bounds = array<i64: 1>, scalar_prefetch = 0 : i64, scratch_operands = 0 : i64, tpu.core_type = #tpu.core_type<tc>, window_params = [{transform_indices = @transform_0, window_bounds = array<i64: 16, 32>}, {pipeline_mode = #tpu.pipeline_mode<synchronous>, transform_indices = @transform_1, window_bounds = array<i64: 32, 128>}, {pipeline_mode = #tpu.pipeline_mode<synchronous>, transform_indices = @transform_2, window_bounds = array<i64: 1, 128>}, {pipeline_mode = #tpu.pipeline_mode<synchronous>, transform_indices = @transform_3, window_bounds = array<i64: 128, 32>}, {pipeline_mode = #tpu.pipeline_mode<synchronous>, transform_indices = @transform_4, window_bounds = array<i64: 1, 32>}, {transform_indices = @transform_5, window_bounds = array<i64: 16, 32>}]} {
    %c0 = arith.constant 0 : index
    %c0_0 = arith.constant 0 : index
    %0 = vector.load %arg1[%c0, %c0_0] : memref<16x32xf32, #tpu.memory_space<vmem>>, vector<16x32xf32>
    %c0_1 = arith.constant 0 : index
    %c0_2 = arith.constant 0 : index
    %1 = vector.load %arg2[%c0_1, %c0_2] : memref<32x128xf32, #tpu.memory_space<vmem>>, vector<32x128xf32>
    %cst = arith.constant dense<0.000000e+00> : vector<16x128xf32>
    %2 = tpu.matmul %0, %1, %cst {dimension_numbers = #tpu.dot_dimension_numbers<[1], [0], [0], [1], [0, 0, 1, 1], [], []>} : vector<16x32xf32>, vector<32x128xf32>, vector<16x128xf32> -> vector<16x128xf32>
    %c0_3 = arith.constant 0 : index
    %c0_4 = arith.constant 0 : index
    %3 = vector.load %arg3[%c0_3, %c0_4] : memref<1x128xf32, #tpu.memory_space<vmem>>, vector<1x128xf32>
    %4 = vector.broadcast %3 : vector<1x128xf32> to vector<16x128xf32>
    %5 = arith.addf %2, %4 : vector<16x128xf32>
    %6 = arith.mulf %5, %5 : vector<16x128xf32>
    %cst_5 = arith.constant 0.797884583 : f32
    %7 = vector.broadcast %cst_5 : f32 to vector<16x128xf32>
    %8 = arith.mulf %7, %5 : vector<16x128xf32>
    %cst_6 = arith.constant 4.471500e-02 : f32
    %9 = vector.broadcast %cst_6 : f32 to vector<16x128xf32>
    %10 = arith.mulf %9, %6 : vector<16x128xf32>
    %cst_7 = arith.constant 1.000000e+00 : f32
    %11 = vector.broadcast %cst_7 : f32 to vector<16x128xf32>
    %12 = arith.addf %11, %10 : vector<16x128xf32>
    %13 = arith.mulf %8, %12 : vector<16x128xf32>
    %cst_8 = arith.constant 5.000000e-01 : f32
    %14 = vector.broadcast %cst_8 : f32 to vector<16x128xf32>
    %15 = arith.mulf %14, %5 : vector<16x128xf32>
    %16 = math.tanh %13 : vector<16x128xf32>
    %cst_9 = arith.constant 1.000000e+00 : f32
    %17 = vector.broadcast %cst_9 : f32 to vector<16x128xf32>
    %18 = arith.addf %17, %16 : vector<16x128xf32>
    %19 = arith.mulf %15, %18 : vector<16x128xf32>
    %c0_10 = arith.constant 0 : index
    %c0_11 = arith.constant 0 : index
    %20 = vector.load %arg4[%c0_10, %c0_11] : memref<128x32xf32, #tpu.memory_space<vmem>>, vector<128x32xf32>
    %cst_12 = arith.constant dense<0.000000e+00> : vector<16x32xf32>
    %21 = tpu.matmul %19, %20, %cst_12 {dimension_numbers = #tpu.dot_dimension_numbers<[1], [0], [0], [1], [0, 0, 1, 1], [], []>} : vector<16x128xf32>, vector<128x32xf32>, vector<16x32xf32> -> vector<16x32xf32>
    %c0_13 = arith.constant 0 : index
    %c0_14 = arith.constant 0 : index
    %22 = vector.load %arg5[%c0_13, %c0_14] : memref<1x32xf32, #tpu.memory_space<vmem>>, vector<1x32xf32>
    %23 = vector.broadcast %22 : vector<1x32xf32> to vector<16x32xf32>
    %24 = arith.addf %21, %23 : vector<16x32xf32>
    %25 = arith.addf %24, %0 : vector<16x32xf32>
    %c0_15 = arith.constant 0 : index
    %c0_16 = arith.constant 0 : index
    %26 = vector.load %arg6[%c0_15, %c0_16] : memref<16x32xf32, #tpu.memory_space<vmem>>, vector<16x32xf32>
    tpu.vector_store %arg6[%c0_15, %c0_16], %25 {strides = array<i32>} : memref<16x32xf32, #tpu.memory_space<vmem>>, vector<16x32xf32>,
    return
  }
  func.func @transform_0(%arg0: i32) -> (i32, i32) {
    %c0_i32 = arith.constant 0 : i32
    %c0_i32_0 = arith.constant 0 : i32
    return %arg0, %c0_i32 : i32, i32
  }
  func.func @transform_1(%arg0: i32) -> (i32, i32) {
    %c0_i32 = arith.constant 0 : i32
    %c0_i32_0 = arith.constant 0 : i32
    %c0_i32_1 = arith.constant 0 : i32
    return %c0_i32, %c0_i32_0 : i32, i32
  }
  func.func @transform_2(%arg0: i32) -> (i32, i32) {
    %c0_i32 = arith.constant 0 : i32
    %c0_i32_0 = arith.constant 0 : i32
    %c0_i32_1 = arith.constant 0 : i32
    return %c0_i32, %c0_i32_0 : i32, i32
  }
  func.func @transform_3(%arg0: i32) -> (i32, i32) {
    %c0_i32 = arith.constant 0 : i32
    %c0_i32_0 = arith.constant 0 : i32
    %c0_i32_1 = arith.constant 0 : i32
    return %c0_i32, %c0_i32_0 : i32, i32
  }
  func.func @transform_4(%arg0: i32) -> (i32, i32) {
    %c0_i32 = arith.constant 0 : i32
    %c0_i32_0 = arith.constant 0 : i32
    %c0_i32_1 = arith.constant 0 : i32
    return %c0_i32, %c0_i32_0 : i32, i32
  }
  func.func @transform_5(%arg0: i32) -> (i32, i32) {
    %c0_i32 = arith.constant 0 : i32
    %c0_i32_0 = arith.constant 0 : i32
    return %arg0, %c0_i32 : i32, i32
  }
}

module attributes {stable_mosaic.version = 11 : i64} {
  func.func @_adapter_kernel(%arg0: i32, %arg1: memref<16x32xf32, #tpu.memory_space<vmem>>, %arg2: memref<32x128xf32, #tpu.memory_space<vmem>>, %arg3: memref<1x128xf32, #tpu.memory_space<vmem>>, %arg4: memref<128x32xf32, #tpu.memory_space<vmem>>, %arg5: memref<1x32xf32, #tpu.memory_space<vmem>>, %arg6: memref<16x32xf32, #tpu.memory_space<vmem>>) attributes {dimension_semantics = [#tpu.dimension_semantics<parallel>], iteration_bounds = array<i64: 1>, scalar_prefetch = 0 : i64, scratch_operands = 0 : i64, tpu.core_type = #tpu.core_type<tc>, window_params = [{transform_indices = @transform_0, window_bounds = array<i64: 16, 32>}, {pipeline_mode = #tpu.pipeline_mode<synchronous>, transform_indices = @transform_1, window_bounds = array<i64: 32, 128>}, {pipeline_mode = #tpu.pipeline_mode<synchronous>, transform_indices = @transform_2, window_bounds = array<i64: 1, 128>}, {pipeline_mode = #tpu.pipeline_mode<synchronous>, transform_indices = @transform_3, window_bounds = array<i64: 128, 32>}, {pipeline_mode = #tpu.pipeline_mode<synchronous>, transform_indices = @transform_4, window_bounds = array<i64: 1, 32>}, {transform_indices = @transform_5, window_bounds = array<i64: 16, 32>}]} {
    %c0 = arith.constant 0 : index
    %c0_0 = arith.constant 0 : index
    %0 = vector.load %arg1[%c0, %c0_0] : memref<16x32xf32, #tpu.memory_space<vmem>>, vector<16x32xf32>
    %c0_1 = arith.constant 0 : index
    %c0_2 = arith.constant 0 : index
    %1 = vector.load %arg2[%c0_1, %c0_2] : memref<32x128xf32, #tpu.memory_space<vmem>>, vector<32x128xf32>
    %cst = arith.constant dense<0.000000e+00> : vector<16x128xf32>
    %2 = tpu.matmul %0, %1, %cst {dimension_numbers = #tpu.dot_dimension_numbers<[1], [0], [0], [1], [0, 0, 1, 1], [], []>} : vector<16x32xf32>, vector<32x128xf32>, vector<16x128xf32> -> vector<16x128xf32>
    %c0_3 = arith.constant 0 : index
    %c0_4 = arith.constant 0 : index
    %3 = vector.load %arg3[%c0_3, %c0_4] : memref<1x128xf32, #tpu.memory_space<vmem>>, vector<1x128xf32>
    %4 = vector.broadcast %3 : vector<1x128xf32> to vector<16x128xf32>
    %5 = arith.addf %2, %4 : vector<16x128xf32>
    %6 = arith.mulf %5, %5 : vector<16x128xf32>
    %cst_5 = arith.constant 0.797884583 : f32
    %7 = vector.broadcast %cst_5 : f32 to vector<16x128xf32>
    %8 = arith.mulf %7, %5 : vector<16x128xf32>
    %cst_6 = arith.constant 4.471500e-02 : f32
    %9 = vector.broadcast %cst_6 : f32 to vector<16x128xf32>
    %10 = arith.mulf %9, %6 : vector<16x128xf32>
    %cst_7 = arith.constant 1.000000e+00 : f32
    %11 = vector.broadcast %cst_7 : f32 to vector<16x128xf32>
    %12 = arith.addf %11, %10 : vector<16x128xf32>
    %13 = arith.mulf %8, %12 : vector<16x128xf32>
    %cst_8 = arith.constant 5.000000e-01 : f32
    %14 = vector.broadcast %cst_8 : f32 to vector<16x128xf32>
    %15 = arith.mulf %14, %5 : vector<16x128xf32>
    %16 = math.tanh %13 : vector<16x128xf32>
    %cst_9 = arith.constant 1.000000e+00 : f32
    %17 = vector.broadcast %cst_9 : f32 to vector<16x128xf32>
    %18 = arith.addf %17, %16 : vector<16x128xf32>
    %19 = arith.mulf %15, %18 : vector<16x128xf32>
    %c0_10 = arith.constant 0 : index
    %c0_11 = arith.constant 0 : index
    %20 = vector.load %arg4[%c0_10, %c0_11] : memref<128x32xf32, #tpu.memory_space<vmem>>, vector<128x32xf32>
    %cst_12 = arith.constant dense<0.000000e+00> : vector<16x32xf32>
    %21 = tpu.matmul %19, %20, %cst_12 {dimension_numbers = #tpu.dot_dimension_numbers<[1], [0], [0], [1], [0, 0, 1, 1], [], []>} : vector<16x128xf32>, vector<128x32xf32>, vector<16x32xf32> -> vector<16x32xf32>
    %c0_13 = arith.constant 0 : index
    %c0_14 = arith.constant 0 : index
    %22 = vector.load %arg5[%c0_13, %c0_14] : memref<1x32xf32, #tpu.memory_space<vmem>>, vector<1x32xf32>
    %23 = vector.broadcast %22 : vector<1x32xf32> to vector<16x32xf32>
    %24 = arith.addf %21, %23 : vector<16x32xf32>
    %25 = arith.addf %24, %0 : vector<16x32xf32>
    %c0_15 = arith.constant 0 : index
    %c0_16 = arith.constant 0 : index
    %26 = vector.load %arg6[%c0_15, %c0_16] : memref<16x32xf32, #tpu.memory_space<vmem>>, vector<16x32xf32>
    tpu.vector_store %arg6[%c0_15, %c0_16], %25 {strides = array<i32>} : memref<16x32xf32, #tpu.memory_space<vmem>>, vector<16x32xf32>,
    return
  }
  func.func @transform_0(%arg0: i32) -> (i32, i32) {
    %c0_i32 = arith.constant 0 : i32
    %c0_i32_0 = arith.constant 0 : i32
    return %arg0, %c0_i32 : i32, i32
  }
  func.func @transform_1(%arg0: i32) -> (i32, i32) {
    %c0_i32 = arith.constant 0 : i32
    %c0_i32_0 = arith.constant 0 : i32
    %c0_i32_1 = arith.constant 0 : i32
    return %c0_i32, %c0_i32_0 : i32, i32
  }
  func.func @transform_2(%arg0: i32) -> (i32, i32) {
    %c0_i32 = arith.constant 0 : i32
    %c0_i32_0 = arith.constant 0 : i32
    %c0_i32_1 = arith.constant 0 : i32
    return %c0_i32, %c0_i32_0 : i32, i32
  }
  func.func @transform_3(%arg0: i32) -> (i32, i32) {
    %c0_i32 = arith.constant 0 : i32
    %c0_i32_0 = arith.constant 0 : i32
    %c0_i32_1 = arith.constant 0 : i32
    return %c0_i32, %c0_i32_0 : i32, i32
  }
  func.func @transform_4(%arg0: i32) -> (i32, i32) {
    %c0_i32 = arith.constant 0 : i32
    %c0_i32_0 = arith.constant 0 : i32
    %c0_i32_1 = arith.constant 0 : i32
    return %c0_i32, %c0_i32_0 : i32, i32
  }
  func.func @transform_5(%arg0: i32) -> (i32, i32) {
    %c0_i32 = arith.constant 0 : i32
    %c0_i32_0 = arith.constant 0 : i32
    return %arg0, %c0_i32 : i32, i32
  }
}

</mosaic_0001>

<llo_original>
// kernel: tpu_custom_call.1
$region0: #{tpu_custom_call.1}
  #allocation0 [shape = 'u32[]', space=smem, size = 0x4, offset = 0x4, fixed_abs, tag = 'smem constant byte address 0x4 - core index']
  #allocation1 [shape = 'u32[144,128]{1,0:T(1,128)}', space=vmem, size = 0x12000, scoped, tag = 'internal scratch']
  %s0 = inlined_call_operand.vmem [shape: f32[16,32], index: 0, kind: input, shape index: {}]
  %s1 = inlined_call_operand.vmem [shape: f32[32,128], index: 1, kind: input, shape index: {}]
  %s2 = inlined_call_operand.vmem [shape: f32[1,128], index: 2, kind: input, shape index: {}]
  %s3 = inlined_call_operand.vmem [shape: f32[128,32], index: 3, kind: input, shape index: {}]
  %s4 = inlined_call_operand.vmem [shape: f32[1,32], index: 4, kind: input, shape index: {}]
  %s5 = inlined_call_operand.hbm [shape: f32[16,32], index: 5, kind: output, shape index: {}]
  %s6 = sld [smem:[#allocation0]]
  $region30: #{tpu_custom_call.1} parent=0
    _
  %s8 = ssub.s32 1, %s6
  %s9 = scalar_select 0, %s8, %s6
  $region1: #{tpu_custom_call.1} parent=0
    #allocation2 [shape = 'u8[8192]{0}', space=vmem, size = 0x2000, scoped, tag = 'output window, operand 0, single buffered']
    #allocation3 [shape = 's32[1]{0}', space=sflag, size = 0x4, scoped, tag = 'scoped memory for tpu_custom_call.1']
    %10 = vsyncpa [#allocation3], 0
    // Predicated region
    $region2: #{tpu_custom_call.1} parent=1 // pred_check
      _
    $region3: #{tpu_custom_call.1} parent=1 // pred_check_branch
      %12 = sbr.rel (0) target = $region5
    $region4: #{tpu_custom_call.1} parent=1 // pred_region
      _
    $region5: #{tpu_custom_call.1} parent=1 // pred_fallthru
      _
    // Predicated region
    $region6: #{tpu_custom_call.1} parent=1 // pred_check
      _
    $region7: #{tpu_custom_call.1} parent=1 // pred_check_branch
      %14 = sbr.rel (0) target = $region9
    $region8: #{tpu_custom_call.1} parent=1 // pred_region
      _
    $region9: #{tpu_custom_call.1} parent=1 // pred_fallthru
      _
    // Predicated region
    $region10: #{tpu_custom_call.1} parent=1 // pred_check
      _
    $region11: #{tpu_custom_call.1} parent=1 // pred_check_branch
      %16 = sbr.rel (0) target = $region13
    $region12: #{tpu_custom_call.1} parent=1 // pred_region
      _
    $region13: #{tpu_custom_call.1} parent=1 // pred_fallthru
      _
    // Predicated region
    $region14: #{tpu_custom_call.1} parent=1 // pred_check
      _
    $region15: #{tpu_custom_call.1} parent=1 // pred_check_branch
      %18 = sbr.rel (0) target = $region17
    $region16: #{tpu_custom_call.1} parent=1 // pred_region
      _
    $region17: #{tpu_custom_call.1} parent=1 // pred_fallthru
      _
    // Predicated region
    $region18: #{tpu_custom_call.1} parent=1 // pred_check
      _
    $region19: #{tpu_custom_call.1} parent=1 // pred_check_branch
      %20 = sbr.rel (0) target = $region21
    $region20: #{tpu_custom_call.1} parent=1 // pred_region
      _
    $region21: #{tpu_custom_call.1} parent=1 // pred_fallthru
      _
    %v21 = vld [vmem:[%s0] sm:$0xff]
    %v22 = vld [vmem:[%s0 + $0x8] sm:$0xff]
    %v23 = vld [vmem:[%s1] sm:$0xff]
    %v24 = vld [vmem:[%s1 + $0x8] sm:$0xff]
    %v25 = vld [vmem:[%s1 + $0x10] sm:$0xff]
    %v26 = vld [vmem:[%s1 + $0x18] sm:$0xff]
    %v27 = vld [vmem:[%s2] sm:$0x1]
    %v29 = vlaneseq
    %v30 = vshrl.u32 %v29, 7
    %v31 = vsub.s32 0, %v30
    %v32 = vrot.slane %v27, %v31
    %vm34 = vcmask 261120
    %v36 = vsel %vm34, %v21, 0
    %v39 = vsel %vm34, %v22, 0
    %41 = vmatprep.subr.mxu0 0.0
    %42 = vmatpush1.msra.mxu0 0.0
    %43 = vmatprep.subr.mxu0 0.0
    %44 = vmatpush1.msra.mxu0 0.0
    %45 = vmatprep.subr.mxu0 0.0
    %46 = vmatpush1.msra.mxu0 0.0
    %47 = vmatprep.subr.mxu0 0.0
    %48 = vmatpush1.msra.mxu0 0.0
    %49 = vmatprep.subr.mxu0 0.0
    %50 = vmatpush1.msra.mxu0 0.0
    %51 = vmatprep.subr.mxu0 0.0
    %52 = vmatpush1.msra.mxu0 0.0
    %53 = vmatprep.subr.mxu0 0.0
    %54 = vmatpush1.msra.mxu0 0.0
    %55 = vmatprep.subr.mxu0 0.0
    %56 = vmatpush1.msra.mxu0 0.0
    %57 = vmatprep.subr.mxu0 0.0
    %58 = vmatpush1.msra.mxu0 0.0
    %59 = vmatprep.subr.mxu0 0.0
    %60 = vmatpush1.msra.mxu0 0.0
    %61 = vmatprep.subr.mxu0 0.0
    %62 = vmatpush1.msra.mxu0 0.0
    %63 = vmatprep.subr.mxu0 0.0
    %64 = vmatpush1.msra.mxu0 0.0
    %65 = vmatprep.subr.mxu0 0.0
    %66 = vmatpush1.msra.mxu0 %v26
    %67 = vmatprep.subr.mxu0 0.0
    %68 = vmatpush1.msra.mxu0 %v25
    %69 = vmatprep.subr.mxu0 0.0
    %70 = vmatpush1.msra.mxu0 %v24
    %71 = vmatprep.subr.mxu0 0.0
    %72 = vmatpush1.msra.mxu0 %v23
    %73 = vmatprep.subr.mxu0 0.0
    %74 = vmatpush2.msra.mxu0 0.0
    %75 = vmatprep.subr.mxu0 0.0
    %76 = vmatpush2.msra.mxu0 0.0
    %77 = vmatprep.subr.mxu0 0.0
    %78 = vmatpush2.msra.mxu0 0.0
    %79 = vmatprep.subr.mxu0 0.0
    %80 = vmatpush2.msra.mxu0 0.0
    %81 = vmatprep.subr.mxu0 0.0
    %82 = vmatpush2.msra.mxu0 0.0
    %83 = vmatprep.subr.mxu0 0.0
    %84 = vmatpush2.msra.mxu0 0.0
    %85 = vmatprep.subr.mxu0 0.0
    %86 = vmatpush2.msra.mxu0 0.0
    %87 = vmatprep.subr.mxu0 0.0
    %88 = vmatpush2.msra.mxu0 0.0
    %89 = vmatprep.subr.mxu0 0.0
    %90 = vmatpush2.msra.mxu0 0.0
    %91 = vmatprep.subr.mxu0 0.0
    %92 = vmatpush2.msra.mxu0 0.0
    %93 = vmatprep.subr.mxu0 0.0
    %94 = vmatpush2.msra.mxu0 0.0
    %95 = vmatprep.subr.mxu0 0.0
    %96 = vmatpush2.msra.mxu0 0.0
    %97 = vmatprep.subr.mxu0 0.0
    %98 = vmatpush2.msra.mxu0 0.0
    %99 = vmatprep.subr.mxu0 0.0
    %100 = vmatpush2.msra.mxu0 0.0
    %101 = vmatprep.subr.mxu0 0.0
    %102 = vmatpush2.msra.mxu0 0.0
    %103 = vmatprep.subr.mxu0 0.0
    %104 = vmatpush2.msra.mxu0 0.0
    %105 = vmatprep.mubr.f32.mxu0 0.0
    %106 = vmatmul.mubr.f32.gmra.mxu0 %v36
    %v107 = vpop.f32.mrf.mxu0
    %v108 = vadd.f32 %v32, %v107
    %v109 = vpop.f32.mrf.mxu0
    %110 = vmatprep.mubr.f32.mxu0 0.0
    %111 = vmatmul.mubr.f32.gmra.mxu0 %v39
    %v112 = vpop.f32.mrf.mxu0
    %v113 = vadd.f32 %v32, %v112
    %v114 = vpop.f32.mrf.mxu0
    %115 = vdwg.mxu0
    %v116 = vmul.f32 %v108, %v108
    %v117 = vmul.f32 %v113, %v113
    %v118 = vmul.f32 %v108, 0.7978846
    %v119 = vmul.f32 %v113, 0.7978846
    %v120 = vmul.f32 %v116, 0.044715
    %v121 = vmul.f32 %v117, 0.044715
    %v122 = vadd.f32 %v120, 1.0
    %v123 = vadd.f32 %v121, 1.0
    %v124 = vmul.f32 %v118, %v122
    %v125 = vmul.f32 %v119, %v123
    %v126 = vmul.f32 %v108, 0.5
    %v127 = vmul.f32 %v113, 0.5
    %v128 = vtanh.pop %v124
    %v129 = vtanh.pop %v125
    %v130 = vadd.f32 %v128, 1.0
    %v131 = vadd.f32 %v129, 1.0
    %v132 = vmul.f32 %v126, %v130
    %v133 = vmul.f32 %v127, %v131
    %v134 = vld [vmem:[%s3] sm:$0xff]
    %v135 = vld [vmem:[%s3 + $0x8] sm:$0xff]
    %v136 = vld [vmem:[%s3 + $0x10] sm:$0xff]
    %v137 = vld [vmem:[%s3 + $0x18] sm:$0xff]
    %v138 = vld [vmem:[%s3 + $0x20] sm:$0xff]
    %v139 = vld [vmem:[%s3 + $0x28] sm:$0xff]
    %v140 = vld [vmem:[%s3 + $0x30] sm:$0xff]
    %v141 = vld [vmem:[%s3 + $0x38] sm:$0xff]
    %v142 = vld [vmem:[%s3 + $0x40] sm:$0xff]
    %v143 = vld [vmem:[%s3 + $0x48] sm:$0xff]
    %v144 = vld [vmem:[%s3 + $0x50] sm:$0xff]
    %v145 = vld [vmem:[%s3 + $0x58] sm:$0xff]
    %v146 = vld [vmem:[%s3 + $0x60] sm:$0xff]
    %v147 = vld [vmem:[%s3 + $0x68] sm:$0xff]
    %v148 = vld [vmem:[%s3 + $0x70] sm:$0xff]
    %v149 = vld [vmem:[%s3 + $0x78] sm:$0xff]
    %v150 = vld [vmem:[%s4] sm:$0x1]
    %v152 = vlaneseq
    %v153 = vshrl.u32 %v152, 7
    %v154 = vsub.s32 0, %v153
    %v155 = vrot.slane %v150, %v154
    %157 = vmatprep.subr.mxu0 0.0
    %158 = vmatpush1.msra.mxu0 %v149
    %159 = vmatprep.subr.mxu0 0.0
    %160 = vmatpush1.msra.mxu0 %v148
    %161 = vmatprep.subr.mxu0 0.0
    %162 = vmatpush1.msra.mxu0 %v147
    %163 = vmatprep.subr.mxu0 0.0
    %164 = vmatpush1.msra.mxu0 %v146
    %165 = vmatprep.subr.mxu0 0.0
    %166 = vmatpush1.msra.mxu0 %v145
    %167 = vmatprep.subr.mxu0 0.0
    %168 = vmatpush1.msra.mxu0 %v144
    %169 = vmatprep.subr.mxu0 0.0
    %170 = vmatpush1.msra.mxu0 %v143
    %171 = vmatprep.subr.mxu0 0.0
    %172 = vmatpush1.msra.mxu0 %v142
    %173 = vmatprep.subr.mxu0 0.0
    %174 = vmatpush1.msra.mxu0 %v141
    %175 = vmatprep.subr.mxu0 0.0
    %176 = vmatpush1.msra.mxu0 %v140
    %177 = vmatprep.subr.mxu0 0.0
    %178 = vmatpush1.msra.mxu0 %v139
    %179 = vmatprep.subr.mxu0 0.0
    %180 = vmatpush1.msra.mxu0 %v138
    %181 = vmatprep.subr.mxu0 0.0
    %182 = vmatpush1.msra.mxu0 %v137
    %183 = vmatprep.subr.mxu0 0.0
    %184 = vmatpush1.msra.mxu0 %v136
    %185 = vmatprep.subr.mxu0 0.0
    %186 = vmatpush1.msra.mxu0 %v135
    %187 = vmatprep.subr.mxu0 0.0
    %188 = vmatpush1.msra.mxu0 %v134
    %189 = vmatprep.subr.mxu0 0.0
    %190 = vmatpush2.msra.mxu0 0.0
    %191 = vmatprep.subr.mxu0 0.0
    %192 = vmatpush2.msra.mxu0 0.0
    %193 = vmatprep.subr.mxu0 0.0
    %194 = vmatpush2.msra.mxu0 0.0
    %195 = vmatprep.subr.mxu0 0.0
    %196 = vmatpush2.msra.mxu0 0.0
    %197 = vmatprep.subr.mxu0 0.0
    %198 = vmatpush2.msra.mxu0 0.0
    %199 = vmatprep.subr.mxu0 0.0
    %200 = vmatpush2.msra.mxu0 0.0
    %201 = vmatprep.subr.mxu0 0.0
    %202 = vmatpush2.msra.mxu0 0.0
    %203 = vmatprep.subr.mxu0 0.0
    %204 = vmatpush2.msra.mxu0 0.0
    %205 = vmatprep.subr.mxu0 0.0
    %206 = vmatpush2.msra.mxu0 0.0
    %207 = vmatprep.subr.mxu0 0.0
    %208 = vmatpush2.msra.mxu0 0.0
    %209 = vmatprep.subr.mxu0 0.0
    %210 = vmatpush2.msra.mxu0 0.0
    %211 = vmatprep.subr.mxu0 0.0
    %212 = vmatpush2.msra.mxu0 0.0
    %213 = vmatprep.subr.mxu0 0.0
    %214 = vmatpush2.msra.mxu0 0.0
    %215 = vmatprep.subr.mxu0 0.0
    %216 = vmatpush2.msra.mxu0 0.0
    %217 = vmatprep.subr.mxu0 0.0
    %218 = vmatpush2.msra.mxu0 0.0
    %219 = vmatprep.subr.mxu0 0.0
    %220 = vmatpush2.msra.mxu0 0.0
    %221 = vmatprep.mubr.f32.mxu0 0.0
    %222 = vmatmul.mubr.f32.gmra.mxu0 %v132
    %v223 = vpop.f32.mrf.mxu0
    %v224 = vadd.f32 %v155, %v223
    %v225 = vpop.f32.mrf.mxu0
    %226 = vmatprep.mubr.f32.mxu0 0.0
    %227 = vmatmul.mubr.f32.gmra.mxu0 %v133
    %v228 = vpop.f32.mrf.mxu0
    %v229 = vadd.f32 %v155, %v228
    %v230 = vpop.f32.mrf.mxu0
    %231 = vdwg.mxu0
    %v232 = vadd.f32 %v224, %v21
    %v233 = vadd.f32 %v229, %v22
    %234 = vst.msk [vmem:[#allocation2] sm:$0xff] %vm34, %v232
    %235 = vst.msk [vmem:[#allocation2 + $0x8] sm:$0xff] %vm34, %v233
    // Predicated region
    $region22: #{tpu_custom_call.1} parent=1 // pred_check
      _
    $region23: #{tpu_custom_call.1} parent=1 // pred_check_branch
      %237 = sbr.rel (0) target = $region25
    $region24: #{tpu_custom_call.1} parent=1 // pred_region
      %s239 = ssub.s32 256, 256
      %240 = vsyncadd [#allocation3], %s239
      %s241 = sshll.u32 [#allocation2], 4
      %s242 = int_to_ptr.vmem [resolvable:$true] %s241
      %247 = dma.vmem_to_hbm [thread:$0]  %s242, 256, %s5, [#allocation3], 128, 128, 8
    $region25: #{tpu_custom_call.1} parent=1 // pred_fallthru
      _
    // Predicated region
    $region26: #{tpu_custom_call.1} parent=1 // pred_check
      _
    $region27: #{tpu_custom_call.1} parent=1 // pred_check_branch
      %249 = sbr.rel (0) target = $region29
    $region28: #{tpu_custom_call.1} parent=1 // pred_region
      %250 = dma.done [#allocation3], 256
    $region29: #{tpu_custom_call.1} parent=1 // pred_fallthru
      _
    %251 = vsyncpa [#allocation3], 1

// kernel: tpu_custom_call.1
$region0: #{tpu_custom_call.1}
  #allocation0 [shape = 'u32[]', space=smem, size = 0x4, offset = 0x4, fixed_abs, tag = 'smem constant byte address 0x4 - core index']
  #allocation1 [shape = 'u32[144,128]{1,0:T(1,128)}', space=vmem, size = 0x12000, scoped, tag = 'internal scratch']
  %s0 = inlined_call_operand.vmem [shape: f32[16,32], index: 0, kind: input, shape index: {}]
  %s1 = inlined_call_operand.vmem [shape: f32[32,128], index: 1, kind: input, shape index: {}]
  %s2 = inlined_call_operand.vmem [shape: f32[1,128], index: 2, kind: input, shape index: {}]
  %s3 = inlined_call_operand.vmem [shape: f32[128,32], index: 3, kind: input, shape index: {}]
  %s4 = inlined_call_operand.vmem [shape: f32[1,32], index: 4, kind: input, shape index: {}]
  %s5 = inlined_call_operand.hbm [shape: f32[16,32], index: 5, kind: output, shape index: {}]
  %s6 = sld [smem:[#allocation0]]
  $region30: #{tpu_custom_call.1} parent=0
    _
  %s8 = ssub.s32 1, %s6
  %s9 = scalar_select 0, %s8, %s6
  $region1: #{tpu_custom_call.1} parent=0
    #allocation2 [shape = 'u8[8192]{0}', space=vmem, size = 0x2000, scoped, tag = 'output window, operand 0, single buffered']
    #allocation3 [shape = 's32[1]{0}', space=sflag, size = 0x4, scoped, tag = 'scoped memory for tpu_custom_call.1']
    %10 = vsyncpa [#allocation3], 0
    // Predicated region
    $region2: #{tpu_custom_call.1} parent=1 // pred_check
      _
    $region3: #{tpu_custom_call.1} parent=1 // pred_check_branch
      %12 = sbr.rel (0) target = $region5
    $region4: #{tpu_custom_call.1} parent=1 // pred_region
      _
    $region5: #{tpu_custom_call.1} parent=1 // pred_fallthru
      _
    // Predicated region
    $region6: #{tpu_custom_call.1} parent=1 // pred_check
      _
    $region7: #{tpu_custom_call.1} parent=1 // pred_check_branch
      %14 = sbr.rel (0) target = $region9
    $region8: #{tpu_custom_call.1} parent=1 // pred_region
      _
    $region9: #{tpu_custom_call.1} parent=1 // pred_fallthru
      _
    // Predicated region
    $region10: #{tpu_custom_call.1} parent=1 // pred_check
      _
    $region11: #{tpu_custom_call.1} parent=1 // pred_check_branch
      %16 = sbr.rel (0) target = $region13
    $region12: #{tpu_custom_call.1} parent=1 // pred_region
      _
    $region13: #{tpu_custom_call.1} parent=1 // pred_fallthru
      _
    // Predicated region
    $region14: #{tpu_custom_call.1} parent=1 // pred_check
      _
    $region15: #{tpu_custom_call.1} parent=1 // pred_check_branch
      %18 = sbr.rel (0) target = $region17
    $region16: #{tpu_custom_call.1} parent=1 // pred_region
      _
    $region17: #{tpu_custom_call.1} parent=1 // pred_fallthru
      _
    // Predicated region
    $region18: #{tpu_custom_call.1} parent=1 // pred_check
      _
    $region19: #{tpu_custom_call.1} parent=1 // pred_check_branch
      %20 = sbr.rel (0) target = $region21
    $region20: #{tpu_custom_call.1} parent=1 // pred_region
      _
    $region21: #{tpu_custom_call.1} parent=1 // pred_fallthru
      _
    %v21 = vld [vmem:[%s0] sm:$0xff]
    %v22 = vld [vmem:[%s0 + $0x8] sm:$0xff]
    %v23 = vld [vmem:[%s1] sm:$0xff]
    %v24 = vld [vmem:[%s1 + $0x8] sm:$0xff]
    %v25 = vld [vmem:[%s1 + $0x10] sm:$0xff]
    %v26 = vld [vmem:[%s1 + $0x18] sm:$0xff]
    %v27 = vld [vmem:[%s2] sm:$0x1]
    %v29 = vlaneseq
    %v30 = vshrl.u32 %v29, 7
    %v31 = vsub.s32 0, %v30
    %v32 = vrot.slane %v27, %v31
    %vm34 = vcmask 261120
    %v36 = vsel %vm34, %v21, 0
    %v39 = vsel %vm34, %v22, 0
    %41 = vmatprep.subr.mxu0 0.0
    %42 = vmatpush1.msra.mxu0 0.0
    %43 = vmatprep.subr.mxu0 0.0
    %44 = vmatpush1.msra.mxu0 0.0
    %45 = vmatprep.subr.mxu0 0.0
    %46 = vmatpush1.msra.mxu0 0.0
    %47 = vmatprep.subr.mxu0 0.0
    %48 = vmatpush1.msra.mxu0 0.0
    %49 = vmatprep.subr.mxu0 0.0
    %50 = vmatpush1.msra.mxu0 0.0
    %51 = vmatprep.subr.mxu0 0.0
    %52 = vmatpush1.msra.mxu0 0.0
    %53 = vmatprep.subr.mxu0 0.0
    %54 = vmatpush1.msra.mxu0 0.0
    %55 = vmatprep.subr.mxu0 0.0
    %56 = vmatpush1.msra.mxu0 0.0
    %57 = vmatprep.subr.mxu0 0.0
    %58 = vmatpush1.msra.mxu0 0.0
    %59 = vmatprep.subr.mxu0 0.0
    %60 = vmatpush1.msra.mxu0 0.0
    %61 = vmatprep.subr.mxu0 0.0
    %62 = vmatpush1.msra.mxu0 0.0
    %63 = vmatprep.subr.mxu0 0.0
    %64 = vmatpush1.msra.mxu0 0.0
    %65 = vmatprep.subr.mxu0 0.0
    %66 = vmatpush1.msra.mxu0 %v26
    %67 = vmatprep.subr.mxu0 0.0
    %68 = vmatpush1.msra.mxu0 %v25
    %69 = vmatprep.subr.mxu0 0.0
    %70 = vmatpush1.msra.mxu0 %v24
    %71 = vmatprep.subr.mxu0 0.0
    %72 = vmatpush1.msra.mxu0 %v23
    %73 = vmatprep.subr.mxu0 0.0
    %74 = vmatpush2.msra.mxu0 0.0
    %75 = vmatprep.subr.mxu0 0.0
    %76 = vmatpush2.msra.mxu0 0.0
    %77 = vmatprep.subr.mxu0 0.0
    %78 = vmatpush2.msra.mxu0 0.0
    %79 = vmatprep.subr.mxu0 0.0
    %80 = vmatpush2.msra.mxu0 0.0
    %81 = vmatprep.subr.mxu0 0.0
    %82 = vmatpush2.msra.mxu0 0.0
    %83 = vmatprep.subr.mxu0 0.0
    %84 = vmatpush2.msra.mxu0 0.0
    %85 = vmatprep.subr.mxu0 0.0
    %86 = vmatpush2.msra.mxu0 0.0
    %87 = vmatprep.subr.mxu0 0.0
    %88 = vmatpush2.msra.mxu0 0.0
    %89 = vmatprep.subr.mxu0 0.0
    %90 = vmatpush2.msra.mxu0 0.0
    %91 = vmatprep.subr.mxu0 0.0
    %92 = vmatpush2.msra.mxu0 0.0
    %93 = vmatprep.subr.mxu0 0.0
    %94 = vmatpush2.msra.mxu0 0.0
    %95 = vmatprep.subr.mxu0 0.0
    %96 = vmatpush2.msra.mxu0 0.0
    %97 = vmatprep.subr.mxu0 0.0
    %98 = vmatpush2.msra.mxu0 0.0
    %99 = vmatprep.subr.mxu0 0.0
    %100 = vmatpush2.msra.mxu0 0.0
    %101 = vmatprep.subr.mxu0 0.0
    %102 = vmatpush2.msra.mxu0 0.0
    %103 = vmatprep.subr.mxu0 0.0
    %104 = vmatpush2.msra.mxu0 0.0
    %105 = vmatprep.mubr.f32.mxu0 0.0
    %106 = vmatmul.mubr.f32.gmra.mxu0 %v36
    %v107 = vpop.f32.mrf.mxu0
    %v108 = vadd.f32 %v32, %v107
    %v109 = vpop.f32.mrf.mxu0
    %110 = vmatprep.mubr.f32.mxu0 0.0
    %111 = vmatmul.mubr.f32.gmra.mxu0 %v39
    %v112 = vpop.f32.mrf.mxu0
    %v113 = vadd.f32 %v32, %v112
    %v114 = vpop.f32.mrf.mxu0
    %115 = vdwg.mxu0
    %v116 = vmul.f32 %v108, %v108
    %v117 = vmul.f32 %v113, %v113
    %v118 = vmul.f32 %v108, 0.7978846
    %v119 = vmul.f32 %v113, 0.7978846
    %v120 = vmul.f32 %v116, 0.044715
    %v121 = vmul.f32 %v117, 0.044715
    %v122 = vadd.f32 %v120, 1.0
    %v123 = vadd.f32 %v121, 1.0
    %v124 = vmul.f32 %v118, %v122
    %v125 = vmul.f32 %v119, %v123
    %v126 = vmul.f32 %v108, 0.5
    %v127 = vmul.f32 %v113, 0.5
    %v128 = vtanh.pop %v124
    %v129 = vtanh.pop %v125
    %v130 = vadd.f32 %v128, 1.0
    %v131 = vadd.f32 %v129, 1.0
    %v132 = vmul.f32 %v126, %v130
    %v133 = vmul.f32 %v127, %v131
    %v134 = vld [vmem:[%s3] sm:$0xff]
    %v135 = vld [vmem:[%s3 + $0x8] sm:$0xff]
    %v136 = vld [vmem:[%s3 + $0x10] sm:$0xff]
    %v137 = vld [vmem:[%s3 + $0x18] sm:$0xff]
    %v138 = vld [vmem:[%s3 + $0x20] sm:$0xff]
    %v139 = vld [vmem:[%s3 + $0x28] sm:$0xff]
    %v140 = vld [vmem:[%s3 + $0x30] sm:$0xff]
    %v141 = vld [vmem:[%s3 + $0x38] sm:$0xff]
    %v142 = vld [vmem:[%s3 + $0x40] sm:$0xff]
    %v143 = vld [vmem:[%s3 + $0x48] sm:$0xff]
    %v144 = vld [vmem:[%s3 + $0x50] sm:$0xff]
    %v145 = vld [vmem:[%s3 + $0x58] sm:$0xff]
    %v146 = vld [vmem:[%s3 + $0x60] sm:$0xff]
    %v147 = vld [vmem:[%s3 + $0x68] sm:$0xff]
    %v148 = vld [vmem:[%s3 + $0x70] sm:$0xff]
    %v149 = vld [vmem:[%s3 + $0x78] sm:$0xff]
    %v150 = vld [vmem:[%s4] sm:$0x1]
    %v152 = vlaneseq
    %v153 = vshrl.u32 %v152, 7
    %v154 = vsub.s32 0, %v153
    %v155 = vrot.slane %v150, %v154
    %157 = vmatprep.subr.mxu0 0.0
    %158 = vmatpush1.msra.mxu0 %v149
    %159 = vmatprep.subr.mxu0 0.0
    %160 = vmatpush1.msra.mxu0 %v148
    %161 = vmatprep.subr.mxu0 0.0
    %162 = vmatpush1.msra.mxu0 %v147
    %163 = vmatprep.subr.mxu0 0.0
    %164 = vmatpush1.msra.mxu0 %v146
    %165 = vmatprep.subr.mxu0 0.0
    %166 = vmatpush1.msra.mxu0 %v145
    %167 = vmatprep.subr.mxu0 0.0
    %168 = vmatpush1.msra.mxu0 %v144
    %169 = vmatprep.subr.mxu0 0.0
    %170 = vmatpush1.msra.mxu0 %v143
    %171 = vmatprep.subr.mxu0 0.0
    %172 = vmatpush1.msra.mxu0 %v142
    %173 = vmatprep.subr.mxu0 0.0
    %174 = vmatpush1.msra.mxu0 %v141
    %175 = vmatprep.subr.mxu0 0.0
    %176 = vmatpush1.msra.mxu0 %v140
    %177 = vmatprep.subr.mxu0 0.0
    %178 = vmatpush1.msra.mxu0 %v139
    %179 = vmatprep.subr.mxu0 0.0
    %180 = vmatpush1.msra.mxu0 %v138
    %181 = vmatprep.subr.mxu0 0.0
    %182 = vmatpush1.msra.mxu0 %v137
    %183 = vmatprep.subr.mxu0 0.0
    %184 = vmatpush1.msra.mxu0 %v136
    %185 = vmatprep.subr.mxu0 0.0
    %186 = vmatpush1.msra.mxu0 %v135
    %187 = vmatprep.subr.mxu0 0.0
    %188 = vmatpush1.msra.mxu0 %v134
    %189 = vmatprep.subr.mxu0 0.0
    %190 = vmatpush2.msra.mxu0 0.0
    %191 = vmatprep.subr.mxu0 0.0
    %192 = vmatpush2.msra.mxu0 0.0
    %193 = vmatprep.subr.mxu0 0.0
    %194 = vmatpush2.msra.mxu0 0.0
    %195 = vmatprep.subr.mxu0 0.0
    %196 = vmatpush2.msra.mxu0 0.0
    %197 = vmatprep.subr.mxu0 0.0
    %198 = vmatpush2.msra.mxu0 0.0
    %199 = vmatprep.subr.mxu0 0.0
    %200 = vmatpush2.msra.mxu0 0.0
    %201 = vmatprep.subr.mxu0 0.0
    %202 = vmatpush2.msra.mxu0 0.0
    %203 = vmatprep.subr.mxu0 0.0
    %204 = vmatpush2.msra.mxu0 0.0
    %205 = vmatprep.subr.mxu0 0.0
    %206 = vmatpush2.msra.mxu0 0.0
    %207 = vmatprep.subr.mxu0 0.0
    %208 = vmatpush2.msra.mxu0 0.0
    %209 = vmatprep.subr.mxu0 0.0
    %210 = vmatpush2.msra.mxu0 0.0
    %211 = vmatprep.subr.mxu0 0.0
    %212 = vmatpush2.msra.mxu0 0.0
    %213 = vmatprep.subr.mxu0 0.0
    %214 = vmatpush2.msra.mxu0 0.0
    %215 = vmatprep.subr.mxu0 0.0
    %216 = vmatpush2.msra.mxu0 0.0
    %217 = vmatprep.subr.mxu0 0.0
    %218 = vmatpush2.msra.mxu0 0.0
    %219 = vmatprep.subr.mxu0 0.0
    %220 = vmatpush2.msra.mxu0 0.0
    %221 = vmatprep.mubr.f32.mxu0 0.0
    %222 = vmatmul.mubr.f32.gmra.mxu0 %v132
    %v223 = vpop.f32.mrf.mxu0
    %v224 = vadd.f32 %v155, %v223
    %v225 = vpop.f32.mrf.mxu0
    %226 = vmatprep.mubr.f32.mxu0 0.0
    %227 = vmatmul.mubr.f32.gmra.mxu0 %v133
    %v228 = vpop.f32.mrf.mxu0
    %v229 = vadd.f32 %v155, %v228
    %v230 = vpop.f32.mrf.mxu0
    %231 = vdwg.mxu0
    %v232 = vadd.f32 %v224, %v21
    %v233 = vadd.f32 %v229, %v22
    %234 = vst.msk [vmem:[#allocation2] sm:$0xff] %vm34, %v232
    %235 = vst.msk [vmem:[#allocation2 + $0x8] sm:$0xff] %vm34, %v233
    // Predicated region
    $region22: #{tpu_custom_call.1} parent=1 // pred_check
      _
    $region23: #{tpu_custom_call.1} parent=1 // pred_check_branch
      %237 = sbr.rel (0) target = $region25
    $region24: #{tpu_custom_call.1} parent=1 // pred_region
      %s239 = ssub.s32 256, 256
      %240 = vsyncadd [#allocation3], %s239
      %s241 = sshll.u32 [#allocation2], 4
      %s242 = int_to_ptr.vmem [resolvable:$true] %s241
      %247 = dma.vmem_to_hbm [thread:$0]  %s242, 256, %s5, [#allocation3], 128, 128, 8
    $region25: #{tpu_custom_call.1} parent=1 // pred_fallthru
      _
    // Predicated region
    $region26: #{tpu_custom_call.1} parent=1 // pred_check
      _
    $region27: #{tpu_custom_call.1} parent=1 // pred_check_branch
      %249 = sbr.rel (0) target = $region29
    $region28: #{tpu_custom_call.1} parent=1 // pred_region
      %250 = dma.done [#allocation3], 256
    $region29: #{tpu_custom_call.1} parent=1 // pred_fallthru
      _
    %251 = vsyncpa [#allocation3], 1

</llo_original>
